<compile_context>
chip_gen: v5e
topology: v5e:2x2
jax: 0.10.0
libtpu: 0.0.40
codegen_flags: <defaults>
</compile_context>

<pallas_src>
import functools
import math

import jax
import jax.numpy as jnp
from jax.experimental import pallas as pl
from jax.experimental.pallas import tpu as pltpu


def detector_kernel(wd_ref, bd_ref, x_ref, o_ref, *, img_w):
    # wd_ref : SMEM (C,)  folded conv weight  (w[1] - w[0])
    # bd_ref : SMEM (1,)  folded conv bias    (b[1] - b[0])
    # x_ref  : VMEM (C, H, WB) block; WB = images_per_block * img_w
    #          (images packed along the lane axis; WB == img_w for the
    #           direct-NCHW path)
    # o_ref  : VMEM (H, WB) block
    C, H, WB = x_ref.shape

    # ---- backbone folded into a single difference channel -------------------
    # d = sum_c (w1c - w0c) * x_c + (b1 - b0)  ==  seg1 - seg0
    acc = wd_ref[0] * x_ref[0, :, :].astype(jnp.float32)
    for c in range(1, C):                    # static unroll; C is small
        acc = acc + wd_ref[c] * x_ref[c, :, :].astype(jnp.float32)
    d = acc + bd_ref[0]
    xp = jnp.maximum(d, 0.0)                 # relu(d)

    # Per-image border masks, built from narrow iotas (broadcast inside where).
    col = jax.lax.broadcasted_iota(jnp.int32, (1, WB), 1)
    if (img_w & (img_w - 1)) == 0:           # power-of-two width
        col_in_img = col & (img_w - 1)
    else:
        col_in_img = col % img_w
    row = jax.lax.broadcasted_iota(jnp.int32, (H, 1), 0)

    # ---- PoolWithHole as a separable 8-neighbour max (XLU rolls) -------------
    # Horizontal neighbours: circular lane rotation, per-image border columns
    # masked to 0 (the reference zero-pads the border).
    left = jnp.where(col_in_img == 0, 0.0, pltpu.roll(xp, shift=1, axis=1))
    right = jnp.where(col_in_img == img_w - 1, 0.0,
                      pltpu.roll(xp, shift=WB - 1, axis=1))
    h = jnp.maximum(left, right)             # same-row max, centre excluded
    v = jnp.maximum(h, xp)                   # full 3-wide row max

    # Vertical neighbours: circular sublane rotation of the row-max, top and
    # bottom border rows masked to 0.
    up = jnp.where(row == 0, 0.0, pltpu.roll(v, shift=1, axis=0))
    down = jnp.where(row == H - 1, 0.0, pltpu.roll(v, shift=H - 1, axis=0))
    xm = jnp.maximum(h, jnp.maximum(up, down))   # 8-neighbour max, >= 0

    o_ref[...] = jnp.where(d > xm, xp, 0.0)      # xp * (d > xm)


def _vmem_limit_bytes(block_in_bytes, block_out_bytes):
    # Double-buffered in/out blocks + headroom for the in-kernel f32
    # temporaries (d, xp, h, v, shifted reads, xm).
    need = 2 * block_in_bytes + 2 * block_out_bytes + 6 * block_out_bytes
    need += 1 << 20
    return int(min(max(need, 16 << 20), 64 << 20))


def _choose_images_per_block(B, C, H, W, itemsize):
    """Pick nb so nb*W is a multiple of 128 (lane-dense stores), capped by a
    VMEM budget, preferring nb that divides B (no batch padding)."""
    base = 128 // math.gcd(W, 128)                       # smallest lane-dense nb
    per_group = (C * itemsize + 4) * H * W * base * 2    # in+out, double-buffered
    budget = 8 << 20
    k_max = max(1, min(budget // max(per_group, 1), max(B // base, 1), 1024))
    k = 1
    for cand in range(int(k_max), 0, -1):
        if B % (base * cand) == 0:
            k = cand
            break
    return base * k


def detector_forward(x, w, b):
    """x: (B, C, H, W) f32/bf16, w: (2, C), b: (2,)  ->  (B, H, W) float32."""
    B, C, H, W = x.shape
    itemsize = jnp.dtype(x.dtype).itemsize

    # Fold the 2-channel 1x1 conv into a single "difference" channel.
    wd = (w[1] - w[0]).astype(jnp.float32)               # (C,)
    bd = (b[1] - b[0]).astype(jnp.float32).reshape(1)    # (1,)

    kernel = functools.partial(detector_kernel, img_w=W)
    smem_spec = pl.BlockSpec(memory_space=pltpu.MemorySpace.SMEM)

    if W % 128 == 0:
        # ---- Path A: lane-aligned width -> grid directly over NCHW batch ----
        # No host-side pack/unpack transposes (they were extra HBM passes).
        block_in = C * H * W * itemsize
        block_out = H * W * 4
        return pl.pallas_call(
            kernel,
            out_shape=jax.ShapeDtypeStruct((B, H, W), jnp.float32),
            grid_spec=pltpu.PrefetchScalarGridSpec(
                num_scalar_prefetch=0,
                grid=(B,),
                in_specs=[
                    smem_spec,                                        # wd
                    smem_spec,                                        # bd
                    pl.BlockSpec((None, C, H, W), lambda i: (i, 0, 0, 0)),
                ],
                out_specs=pl.BlockSpec((None, H, W), lambda i: (i, 0, 0)),
            ),
            compiler_params=pltpu.CompilerParams(
                dimension_semantics=("parallel",),
                vmem_limit_bytes=_vmem_limit_bytes(block_in, block_out)),
        )(wd, bd, x)

    # ---- Path B: small W -> pack images along the 128-wide lane axis --------
    nb = _choose_images_per_block(B, C, H, W, itemsize)
    B_pad = -(-B // nb) * nb
    if B_pad != B:
        # Zero-pad with fake images so every block is lane-dense; results for
        # the padded images are sliced off below.
        x = jnp.pad(x, ((0, B_pad - B), (0, 0), (0, 0), (0, 0)))
    WB = nb * W
    num_blocks = B_pad // nb

    # Pack images along the lane axis: (B_pad, C, H, W) -> (C, H, B_pad*W).
    x_packed = jnp.transpose(x, (1, 2, 0, 3)).reshape(C, H, B_pad * W)

    block_in = C * H * WB * itemsize
    block_out = H * WB * 4
    out_packed = pl.pallas_call(
        kernel,
        out_shape=jax.ShapeDtypeStruct((H, B_pad * W), jnp.float32),
        grid_spec=pltpu.PrefetchScalarGridSpec(
            num_scalar_prefetch=0,
            grid=(num_blocks,),
            in_specs=[
                smem_spec,                                            # wd
                smem_spec,                                            # bd
                pl.BlockSpec((C, H, WB), lambda i: (0, 0, i)),
            ],
            out_specs=pl.BlockSpec((H, WB), lambda i: (0, i)),
        ),
        compiler_params=pltpu.CompilerParams(
            dimension_semantics=("parallel",),
            vmem_limit_bytes=_vmem_limit_bytes(block_in, block_out)),
    )(wd, bd, x_packed)

    # Unpack: (H, B_pad*W) -> (B_pad, H, W) -> drop padded images.
    out = jnp.transpose(out_packed.reshape(H, B_pad, W), (1, 0, 2))
    return out[:B]


def detector_reference(x, w, b):
    """Pure-JAX reference matching the PyTorch semantics (1x1 conv backbone)."""
    seg = (x[:, None, :, :, :] * w[None, :, :, None, None]).sum(axis=2)
    seg = seg + b[None, :, None, None]
    d = seg[:, 1] - seg[:, 0]
    xp = jnp.maximum(d, 0.0)
    H, W = xp.shape[1], xp.shape[2]
    padded = jnp.pad(xp, ((0, 0), (1, 1), (1, 1)))
    xm = jnp.zeros_like(xp)
    for i in range(3):
        for j in range(3):
            if i != 1 or j != 1:
                xm = jnp.maximum(xm, padded[:, i:i + H, j:j + W])
    return xp * (d > xm).astype(jnp.float32)


if __name__ == "__main__":
    key = jax.random.PRNGKey(0)
    kx, kw, kb, kx2, kw2, kb2 = jax.random.split(key, 6)

    # Quantize the random test data to multiples of 1/64 so the folded
    # (w1 - w0) accumulation in the kernel and the unfolded seg1 - seg0 in the
    # reference are exact (bit-identical) in f32 -- the strict (d > xm)
    # threshold then cannot flip from rounding differences.  With real
    # unquantized weights, pixels exactly on a plateau may flip.
    def q(a, s=64.0):
        return jnp.round(a * s) / s

    # ---- Path B: small W (lane-packed batch) --------------------------------
    B, C, H, W = 2, 4, 16, 16
    x = q(jax.random.normal(kx, (B, C, H, W), dtype=jnp.float32))
    w = q(jax.random.normal(kw, (2, C), dtype=jnp.float32) * 0.5)
    b = q(jax.random.normal(kb, (2,), dtype=jnp.float32) * 0.1)

    out = detector_forward(x, w, b)
    jax.block_until_ready(out)
    ref = detector_reference(x, w, b)
    assert out.shape == (B, H, W)
    assert jnp.allclose(out, ref, atol=1e-5, rtol=1e-5)

    # ---- Path A: lane-aligned W (direct NCHW grid over the batch) -----------
    B2, C2, H2, W2 = 2, 3, 8, 128
    x2 = q(jax.random.normal(kx2, (B2, C2, H2, W2), dtype=jnp.float32))
    w2 = q(jax.random.normal(kw2, (2, C2), dtype=jnp.float32) * 0.5)
    b2 = q(jax.random.normal(kb2, (2,), dtype=jnp.float32) * 0.1)

    out2 = detector_forward(x2, w2, b2)
    jax.block_until_ready(out2)
    ref2 = detector_reference(x2, w2, b2)
    assert out2.shape == (B2, H2, W2)
    assert jnp.allclose(out2, ref2, atol=1e-5, rtol=1e-5)

    print("KERNEL_OK")
</pallas_src>

<mosaic_0001>
module attributes {stable_mosaic.version = 11 : i64} {
  func.func @detector_kernel(%arg0: i32, %arg1: memref<4xf32, #tpu.memory_space<smem>>, %arg2: memref<1xf32, #tpu.memory_space<smem>>, %arg3: memref<4x16x128xf32, #tpu.memory_space<vmem>>, %arg4: memref<16x128xf32, #tpu.memory_space<vmem>>) attributes {dimension_semantics = [#tpu.dimension_semantics<parallel>], iteration_bounds = array<i64: 1>, scalar_prefetch = 0 : i64, scratch_operands = 0 : i64, tpu.core_type = #tpu.core_type<tc>, window_params = [{transform_indices = @transform_0, window_bounds = array<i64: 4>}, {transform_indices = @transform_1, window_bounds = array<i64: 1>}, {transform_indices = @transform_2, window_bounds = array<i64: 4, 16, 128>}, {transform_indices = @transform_3, window_bounds = array<i64: 16, 128>}]} {
    %c0 = arith.constant 0 : index
    %0 = memref.load %arg1[%c0] : memref<4xf32, #tpu.memory_space<smem>>
    %c0_0 = arith.constant 0 : index
    %c0_1 = arith.constant 0 : index
    %c0_2 = arith.constant 0 : index
    %1 = vector.load %arg3[%c0_0, %c0_1, %c0_2] : memref<4x16x128xf32, #tpu.memory_space<vmem>>, vector<1x16x128xf32>
    %2 = vector.shape_cast %1 : vector<1x16x128xf32> to vector<16x128xf32>
    %3 = vector.broadcast %0 : f32 to vector<16x128xf32>
    %4 = arith.mulf %3, %2 : vector<16x128xf32>
    %c1 = arith.constant 1 : index
    %5 = memref.load %arg1[%c1] : memref<4xf32, #tpu.memory_space<smem>>
    %c1_3 = arith.constant 1 : index
    %c0_4 = arith.constant 0 : index
    %c0_5 = arith.constant 0 : index
    %6 = vector.load %arg3[%c1_3, %c0_4, %c0_5] : memref<4x16x128xf32, #tpu.memory_space<vmem>>, vector<1x16x128xf32>
    %7 = vector.shape_cast %6 : vector<1x16x128xf32> to vector<16x128xf32>
    %8 = vector.broadcast %5 : f32 to vector<16x128xf32>
    %9 = arith.mulf %8, %7 : vector<16x128xf32>
    %10 = arith.addf %4, %9 : vector<16x128xf32>
    %c2 = arith.constant 2 : index
    %11 = memref.load %arg1[%c2] : memref<4xf32, #tpu.memory_space<smem>>
    %c2_6 = arith.constant 2 : index
    %c0_7 = arith.constant 0 : index
    %c0_8 = arith.constant 0 : index
    %12 = vector.load %arg3[%c2_6, %c0_7, %c0_8] : memref<4x16x128xf32, #tpu.memory_space<vmem>>, vector<1x16x128xf32>
    %13 = vector.shape_cast %12 : vector<1x16x128xf32> to vector<16x128xf32>
    %14 = vector.broadcast %11 : f32 to vector<16x128xf32>
    %15 = arith.mulf %14, %13 : vector<16x128xf32>
    %16 = arith.addf %10, %15 : vector<16x128xf32>
    %c3 = arith.constant 3 : index
    %17 = memref.load %arg1[%c3] : memref<4xf32, #tpu.memory_space<smem>>
    %c3_9 = arith.constant 3 : index
    %c0_10 = arith.constant 0 : index
    %c0_11 = arith.constant 0 : index
    %18 = vector.load %arg3[%c3_9, %c0_10, %c0_11] : memref<4x16x128xf32, #tpu.memory_space<vmem>>, vector<1x16x128xf32>
    %19 = vector.shape_cast %18 : vector<1x16x128xf32> to vector<16x128xf32>
    %20 = vector.broadcast %17 : f32 to vector<16x128xf32>
    %21 = arith.mulf %20, %19 : vector<16x128xf32>
    %22 = arith.addf %16, %21 : vector<16x128xf32>
    %c0_12 = arith.constant 0 : index
    %23 = memref.load %arg2[%c0_12] : memref<1xf32, #tpu.memory_space<smem>>
    %24 = vector.broadcast %23 : f32 to vector<16x128xf32>
    %25 = arith.addf %22, %24 : vector<16x128xf32>
    %cst = arith.constant 0.000000e+00 : f32
    %26 = vector.broadcast %cst : f32 to vector<16x128xf32>
    %27 = arith.maximumf %25, %26 : vector<16x128xf32>
    %28 = tpu.iota {dimensions = array<i32: 1>} : vector<1x128xi32>
    %c15_i32 = arith.constant 15 : i32
    %29 = vector.broadcast %c15_i32 : i32 to vector<1x128xi32>
    %30 = arith.andi %28, %29 : vector<1x128xi32>
    %31 = tpu.iota {dimensions = array<i32: 0>} : vector<16x1xi32>
    %c0_i32 = arith.constant 0 : i32
    %32 = vector.broadcast %c0_i32 : i32 to vector<1x128xi32>
    %33 = arith.cmpi eq, %30, %32 : vector<1x128xi32>
    %c1_i32 = arith.constant 1 : i32
    %34 = tpu.dynamic_rotate %27 by %c1_i32 dim 1 : vector<16x128xf32>, i32 -> vector<16x128xf32>
    %cst_13 = arith.constant 0.000000e+00 : f32
    %35 = vector.shape_cast %33 : vector<1x128xi1> to vector<1x128xi1>
    %36 = vector.broadcast %35 : vector<1x128xi1> to vector<16x128xi1>
    %37 = vector.broadcast %cst_13 : f32 to vector<16x128xf32>
    %38 = arith.select %36, %37, %34 : vector<16x128xi1>, vector<16x128xf32>
    %c15_i32_14 = arith.constant 15 : i32
    %39 = vector.broadcast %c15_i32_14 : i32 to vector<1x128xi32>
    %40 = arith.cmpi eq, %30, %39 : vector<1x128xi32>
    %c127_i32 = arith.constant 127 : i32
    %41 = tpu.dynamic_rotate %27 by %c127_i32 dim 1 : vector<16x128xf32>, i32 -> vector<16x128xf32>
    %cst_15 = arith.constant 0.000000e+00 : f32
    %42 = vector.shape_cast %40 : vector<1x128xi1> to vector<1x128xi1>
    %43 = vector.broadcast %42 : vector<1x128xi1> to vector<16x128xi1>
    %44 = vector.broadcast %cst_15 : f32 to vector<16x128xf32>
    %45 = arith.select %43, %44, %41 : vector<16x128xi1>, vector<16x128xf32>
    %46 = arith.maximumf %38, %45 : vector<16x128xf32>
    %47 = arith.maximumf %46, %27 : vector<16x128xf32>
    %c0_i32_16 = arith.constant 0 : i32
    %48 = vector.broadcast %c0_i32_16 : i32 to vector<16x1xi32>
    %49 = arith.cmpi eq, %31, %48 : vector<16x1xi32>
    %c1_i32_17 = arith.constant 1 : i32
    %50 = tpu.dynamic_rotate %47 by %c1_i32_17 dim 0 : vector<16x128xf32>, i32 -> vector<16x128xf32>
    %cst_18 = arith.constant 0.000000e+00 : f32
    %51 = vector.shape_cast %49 : vector<16x1xi1> to vector<16x1xi1>
    %52 = vector.broadcast %51 : vector<16x1xi1> to vector<16x128xi1>
    %53 = vector.broadcast %cst_18 : f32 to vector<16x128xf32>
    %54 = arith.select %52, %53, %50 : vector<16x128xi1>, vector<16x128xf32>
    %c15_i32_19 = arith.constant 15 : i32
    %55 = vector.broadcast %c15_i32_19 : i32 to vector<16x1xi32>
    %56 = arith.cmpi eq, %31, %55 : vector<16x1xi32>
    %c15_i32_20 = arith.constant 15 : i32
    %57 = tpu.dynamic_rotate %47 by %c15_i32_20 dim 0 : vector<16x128xf32>, i32 -> vector<16x128xf32>
    %cst_21 = arith.constant 0.000000e+00 : f32
    %58 = vector.shape_cast %56 : vector<16x1xi1> to vector<16x1xi1>
    %59 = vector.broadcast %58 : vector<16x1xi1> to vector<16x128xi1>
    %60 = vector.broadcast %cst_21 : f32 to vector<16x128xf32>
    %61 = arith.select %59, %60, %57 : vector<16x128xi1>, vector<16x128xf32>
    %62 = arith.maximumf %54, %61 : vector<16x128xf32>
    %63 = arith.maximumf %46, %62 : vector<16x128xf32>
    %64 = arith.cmpf ogt, %25, %63 : vector<16x128xf32>
    %cst_22 = arith.constant 0.000000e+00 : f32
    %65 = vector.broadcast %cst_22 : f32 to vector<16x128xf32>
    %66 = arith.select %64, %27, %65 : vector<16x128xi1>, vector<16x128xf32>
    %c0_23 = arith.constant 0 : index
    %c0_24 = arith.constant 0 : index
    %67 = vector.load %arg4[%c0_23, %c0_24] : memref<16x128xf32, #tpu.memory_space<vmem>>, vector<16x128xf32>
    tpu.vector_store %arg4[%c0_23, %c0_24], %66 {strides = array<i32>} : memref<16x128xf32, #tpu.memory_space<vmem>>, vector<16x128xf32>,
    return
  }
  func.func @transform_0(%arg0: i32) -> i32 {
    %c0_i32 = arith.constant 0 : i32
    %c0_i32_0 = arith.constant 0 : i32
    return %c0_i32 : i32
  }
  func.func @transform_1(%arg0: i32) -> i32 {
    %c0_i32 = arith.constant 0 : i32
    %c0_i32_0 = arith.constant 0 : i32
    return %c0_i32 : i32
  }
  func.func @transform_2(%arg0: i32) -> (i32, i32, i32) {
    %c0_i32 = arith.constant 0 : i32
    %c0_i32_0 = arith.constant 0 : i32
    %c0_i32_1 = arith.constant 0 : i32
    return %c0_i32, %c0_i32_0, %arg0 : i32, i32, i32
  }
  func.func @transform_3(%arg0: i32) -> (i32, i32) {
    %c0_i32 = arith.constant 0 : i32
    %c0_i32_0 = arith.constant 0 : i32
    return %c0_i32, %arg0 : i32, i32
  }
}

</mosaic_0001>

<llo_original>
// kernel: tpu_custom_call.1
$region0: #{tpu_custom_call.1}
  #allocation0 [shape = 'u32[]', space=smem, size = 0x4, offset = 0x4, fixed_abs, tag = 'smem constant byte address 0x4 - core index']
  #allocation1 [shape = 'u32[72,128]{1,0:T(1,128)}', space=vmem, size = 0x9000, scoped, tag = 'internal scratch']
  #allocation2 [shape = 'f32[1]{0:T(128)S(6)}', space=smem, size = 0x200, scoped, tag = 'scoped memory for tpu_custom_call.1']
  %s0 = inlined_call_operand.vmem [shape: f32[4], index: 0, kind: input, shape index: {}]
  %s1 = inlined_call_operand.<no memory space> [shape: f32[1], index: 1, kind: input, shape index: {}]
  %s2 = inlined_call_operand.hbm [shape: f32[4,16,128], index: 2, kind: input, shape index: {}]
  %s3 = inlined_call_operand.hbm [shape: f32[16,128], index: 3, kind: output, shape index: {}]
  %s4 = sld [smem:[#allocation0]]
  $region30: #{tpu_custom_call.1} parent=0
    _
  %s6 = ssub.s32 1, %s4
  %s7 = scalar_select 0, %s6, %s4
  %8 = sst [smem:[#allocation2]] %s1
  $region1: #{tpu_custom_call.1} parent=0
    #allocation3 [shape = 'u8[512]{0}', space=smem, size = 0x200, scoped, tag = 'input window, operand 0, single buffered']
    #allocation4 [shape = 's32[1]{0}', space=sflag, size = 0x4, scoped, tag = 'scoped memory for tpu_custom_call.1']
    #allocation5 [shape = 's32[1]{0}', space=sflag, size = 0x4, scoped, tag = 'scoped memory for tpu_custom_call.1']
    #allocation6 [shape = 's32[1]{0}', space=sflag, size = 0x4, scoped, tag = 'scoped memory for tpu_custom_call.1']
    #allocation7 [shape = 'u8[32768]{0}', space=vmem, size = 0x8000, scoped, tag = 'input window, operand 2, single buffered']
    #allocation8 [shape = 'u8[8192]{0}', space=vmem, size = 0x2000, scoped, tag = 'output window, operand 0, single buffered']
    %9 = vsyncpa [#allocation6], 0
    %10 = vsyncpa [#allocation4], 0
    %11 = vsyncpa [#allocation5], 0
    // Predicated region
    $region2: #{tpu_custom_call.1} parent=1 // pred_check
      _
    $region3: #{tpu_custom_call.1} parent=1 // pred_check_branch
      %13 = sbr.rel (0) target = $region5
    $region4: #{tpu_custom_call.1} parent=1 // pred_region
      %15 = vsyncadd [#allocation6], 0
      %s17 = sshll.u32 %s0, 4
      %s18 = int_to_ptr.vmem [resolvable:$true] %s17
      %20 = dma.vmem_to_smem %s18, 16, [#allocation3], [#allocation6]
    $region5: #{tpu_custom_call.1} parent=1 // pred_fallthru
      _
    // Predicated region
    $region6: #{tpu_custom_call.1} parent=1 // pred_check
      _
    $region7: #{tpu_custom_call.1} parent=1 // pred_check_branch
      %22 = sbr.rel (0) target = $region9
    $region8: #{tpu_custom_call.1} parent=1 // pred_region
      _
    $region9: #{tpu_custom_call.1} parent=1 // pred_fallthru
      _
    // Predicated region
    $region10: #{tpu_custom_call.1} parent=1 // pred_check
      _
    $region11: #{tpu_custom_call.1} parent=1 // pred_check_branch
      %24 = sbr.rel (0) target = $region13
    $region12: #{tpu_custom_call.1} parent=1 // pred_region
      %26 = vsyncadd [#allocation4], 0
      %s27 = sshll.u32 %s2, 4
      %s28 = int_to_ptr.hbm [resolvable:$true] %s27
      %s29 = sshll.u32 [#allocation7], 4
      %s30 = int_to_ptr.vmem [resolvable:$true] %s29
      %35 = dma.hbm_to_vmem [thread:$0]  %s28, 1024, %s30, [#allocation4], 128, 128, 8
    $region13: #{tpu_custom_call.1} parent=1 // pred_fallthru
      _
    // Predicated region
    $region14: #{tpu_custom_call.1} parent=1 // pred_check
      _
    $region15: #{tpu_custom_call.1} parent=1 // pred_check_branch
      %37 = sbr.rel (0) target = $region17
    $region16: #{tpu_custom_call.1} parent=1 // pred_region
      %39 = dma.done [#allocation6], 16
    $region17: #{tpu_custom_call.1} parent=1 // pred_fallthru
      _
    // Predicated region
    $region18: #{tpu_custom_call.1} parent=1 // pred_check
      _
    $region19: #{tpu_custom_call.1} parent=1 // pred_check_branch
      %41 = sbr.rel (0) target = $region21
    $region20: #{tpu_custom_call.1} parent=1 // pred_region
      %43 = dma.done [#allocation4], 1024
    $region21: #{tpu_custom_call.1} parent=1 // pred_fallthru
      _
    %44 = sfence
    %s45 = sld [smem:[#allocation3]]
    %v46 = vld [vmem:[#allocation7] sm:$0xff]
    %v47 = vld [vmem:[#allocation7 + $0x8] sm:$0xff]
    %v48 = vstv %s45
    %v49 = vmul.f32 %v48, %v46
    %v50 = vmul.f32 %v48, %v47
    %s51 = sld [smem:[#allocation3 + $0x1]]
    %s52 = scalar_lea.vmem [#allocation7], 16
    %v53 = vld [vmem:[%s52] sm:$0xff]
    %v54 = vld [vmem:[%s52 + $0x8] sm:$0xff]
    %v55 = vstv %s51
    %v56 = vmul.f32 %v55, %v53
    %v57 = vmul.f32 %v55, %v54
    %v58 = vadd.f32 %v49, %v56
    %v59 = vadd.f32 %v50, %v57
    %s60 = sld [smem:[#allocation3 + $0x2]]
    %s61 = scalar_lea.vmem [#allocation7], 32
    %v62 = vld [vmem:[%s61] sm:$0xff]
    %v63 = vld [vmem:[%s61 + $0x8] sm:$0xff]
    %v64 = vstv %s60
    %v65 = vmul.f32 %v64, %v62
    %v66 = vmul.f32 %v64, %v63
    %v67 = vadd.f32 %v58, %v65
    %v68 = vadd.f32 %v59, %v66
    %s69 = sld [smem:[#allocation3 + $0x3]]
    %s70 = scalar_lea.vmem [#allocation7], 48
    %v71 = vld [vmem:[%s70] sm:$0xff]
    %v72 = vld [vmem:[%s70 + $0x8] sm:$0xff]
    %v73 = vstv %s69
    %v74 = vmul.f32 %v73, %v71
    %v75 = vmul.f32 %v73, %v72
    %v76 = vadd.f32 %v67, %v74
    %v77 = vadd.f32 %v68, %v75
    %s78 = sld [smem:[#allocation2]]
    %v79 = vstv %s78
    %v80 = vadd.f32 %v76, %v79
    %v81 = vadd.f32 %v77, %v79
    %v82 = vmax.f32 %v80, 0.0
    %v83 = vmax.f32 %v81, 0.0
    %v84 = vlaneseq
    %v85 = vand.u32 %v84, 127
    %v86 = vand.u32 %v85, 15
    %v87 = vlaneseq
    %v88 = vshrl.u32 %v87, 7
    %v89 = vadd.s32 %v88, 8
    %vm90 = vcmp.eq.s32.totalorder %v86, 0
    %91 = vrot.lane.b32.xlu0 %v82, 1
    %v92 = vpop.permute.xlu0 %91
    %93 = vrot.lane.b32.xlu0 %v83, 1
    %v94 = vpop.permute.xlu0 %93
    %v95 = vsel %vm90, 1, 0
    %vm96 = vcmp.eq.s32.totalorder %v95, 1
    %v97 = vsel %vm96, 0.0, %v92
    %v98 = vsel %vm96, 0.0, %v94
    %vm99 = vcmp.eq.s32.totalorder %v86, 15
    %100 = vrot.lane.b32.xlu0 %v82, 127
    %v101 = vpop.permute.xlu0 %100
    %102 = vrot.lane.b32.xlu0 %v83, 127
    %v103 = vpop.permute.xlu0 %102
    %v104 = vsel %vm99, 1, 0
    %vm105 = vcmp.eq.s32.totalorder %v104, 1
    %v106 = vsel %vm105, 0.0, %v101
    %v107 = vsel %vm105, 0.0, %v103
    %v108 = vmax.f32 %v97, %v106
    %v109 = vmax.f32 %v98, %v107
    %v110 = vmax.f32 %v108, %v82
    %v111 = vmax.f32 %v109, %v83
    %vm112 = vcmp.eq.s32.totalorder %v88, 0
    %vm113 = vcmp.eq.s32.totalorder %v89, 0
    %v114 = vrot.slane %v110, 7
    %v115 = vrot.slane %v111, 7
    %vm116 = vcmp.lt.s32.totalorder %v88, 1
    %v117 = vsel %vm116, %v114, %v115
    %v118 = vsel %vm116, %v115, %v114
    %v119 = vsel %vm112, 1, 0
    %v120 = vsel %vm113, 1, 0
    %vm121 = vcmp.eq.s32.totalorder %v119, 1
    %vm122 = vcmp.eq.s32.totalorder %v120, 1
    %v123 = vsel %vm121, 0.0, %v118
    %v124 = vsel %vm122, 0.0, %v117
    %vm125 = vcmp.eq.s32.totalorder %v88, 15
    %vm126 = vcmp.eq.s32.totalorder %v89, 15
    %v127 = vrot.slane %v110, 1
    %v128 = vrot.slane %v111, 1
    %vm129 = vcmp.lt.s32.totalorder %v88, 7
    %v130 = vsel %vm129, %v127, %v128
    %v131 = vsel %vm129, %v128, %v127
    %v132 = vsel %vm125, 1, 0
    %v133 = vsel %vm126, 1, 0
    %vm134 = vcmp.eq.s32.totalorder %v132, 1
    %vm135 = vcmp.eq.s32.totalorder %v133, 1
    %v136 = vsel %vm134, 0.0, %v130
    %v137 = vsel %vm135, 0.0, %v131
    %v138 = vmax.f32 %v123, %v136
    %v139 = vmax.f32 %v124, %v137
    %v140 = vmax.f32 %v108, %v138
    %v141 = vmax.f32 %v109, %v139
    %vm142 = vcmp.gt.f32.partialorder %v80, %v140
    %vm143 = vcmp.gt.f32.partialorder %v81, %v141
    %v144 = vsel %vm142, %v82, 0.0
    %v145 = vsel %vm143, %v83, 0.0
    %146 = vst [vmem:[#allocation8] sm:$0xff] %v144
    %147 = vst [vmem:[#allocation8 + $0x8] sm:$0xff] %v145
    // Predicated region
    $region22: #{tpu_custom_call.1} parent=1 // pred_check
      _
    $region23: #{tpu_custom_call.1} parent=1 // pred_check_branch
      %149 = sbr.rel (0) target = $region25
    $region24: #{tpu_custom_call.1} parent=1 // pred_region
      %151 = vsyncadd [#allocation5], 0
      %s152 = sshll.u32 [#allocation8], 4
      %s153 = int_to_ptr.vmem [resolvable:$true] %s152
      %s154 = sshll.u32 %s3, 4
      %s155 = int_to_ptr.hbm [resolvable:$true] %s154
      %160 = dma.vmem_to_hbm [thread:$0]  %s153, 256, %s155, [#allocation5], 128, 128, 8
    $region25: #{tpu_custom_call.1} parent=1 // pred_fallthru
      _
    // Predicated region
    $region26: #{tpu_custom_call.1} parent=1 // pred_check
      _
    $region27: #{tpu_custom_call.1} parent=1 // pred_check_branch
      %162 = sbr.rel (0) target = $region29
    $region28: #{tpu_custom_call.1} parent=1 // pred_region
      %164 = dma.done [#allocation5], 256
    $region29: #{tpu_custom_call.1} parent=1 // pred_fallthru
      _
    %165 = vsyncpa [#allocation4], 1
    %166 = vsyncpa [#allocation5], 1
    %167 = vsyncpa [#allocation6], 1

</llo_original>
